<compile_context>
chip_gen: v7x
topology: tpu7x:2x2x1
jax: 0.10.0
libtpu: 0.0.40
codegen_flags: <defaults>
</compile_context>

<pallas_src>
import jax
import jax.numpy as jnp
from jax.experimental import pallas as pl
from jax.experimental.pallas import tpu as pltpu

HIDDEN = 256   # fixed by the PyTorch module (fc1 out / fc2 in)
LANE = 128     # TPU lane width


def _round_up(n, m):
    return ((n + m - 1) // m) * m


def policy_mlp_kernel(x_ref, w1_ref, b1_ref, w2_ref, b2_ref, o_ref):
    # x arrives as f32; cast to bf16 on the VPU right before the MXU pass
    # (cheaper than a separate XLA cast pass over HBM in the wrapper).
    x = x_ref[...].astype(jnp.bfloat16)
    # fc1: bf16 operands on the MXU, f32 accumulation.
    h = jnp.dot(x, w1_ref[...], preferred_element_type=jnp.float32)
    # Bias add + ReLU in f32. b1_ref is (1, HIDDEN): sublane broadcast is a
    # plain vadd, no pre-broadcast tile needed.
    h = jnp.maximum(h + b1_ref[...], 0.0)
    # fc2: cast activations back to bf16 for the second MXU pass.
    out = jnp.dot(h.astype(jnp.bfloat16), w2_ref[...],
                  preferred_element_type=jnp.float32)
    o_ref[...] = (out + b2_ref[...]).astype(o_ref.dtype)


def prepare_params(w1, b1, w2, b2):
    """One-time (per parameter update) layout prep, hoisted out of the hot
    forward path: bf16 weight casts and lane-dense padding of the output dim.
    w1: (input_dim, 256), b1: (256,), w2: (256, output_dim), b2: (output_dim,)."""
    out_dim = w2.shape[1]
    out_pad = _round_up(out_dim, LANE)
    w1_bf = w1.astype(jnp.bfloat16)
    w2_bf = jnp.pad(w2, ((0, 0), (0, out_pad - out_dim))).astype(jnp.bfloat16)
    b1_row = b1.reshape(1, HIDDEN).astype(jnp.float32)
    b2_row = jnp.pad(b2.reshape(1, -1).astype(jnp.float32),
                     ((0, 0), (0, out_pad - out_dim)))
    return dict(w1=w1_bf, b1=b1_row, w2=w2_bf, b2=b2_row,
                out_dim=out_dim, out_pad=out_pad)


def _choose_block_b(B):
    """Pick the batch tile: large tiles (grid-step overhead dominates here),
    but keep >=2 grid steps when the batch allows it so the 'parallel' axis
    can shard over v7x's 2 TensorCores. Cap at 512 rows."""
    if B <= 8:
        return 8
    half = _round_up(-(-B // 2), 8)     # ceil(B/2), rounded up to sublane mult
    return max(8, min(512, half))


def policy_network_forward(x, params, *, block_b=None):
    """x: (B, input_dim) f32. Returns (B, output_dim) f32, matching
    relu(x @ w1 + b1) @ w2 + b2 (the PyTorch forward)."""
    B, in_dim = x.shape
    out_dim, out_pad = params["out_dim"], params["out_pad"]

    if block_b is None:
        block_b = _choose_block_b(B)

    # Pad batch to a multiple of the tile. Padded rows compute
    # relu(b1) @ w2 + b2 (harmless garbage) and are sliced off below.
    Bp = _round_up(B, block_b)
    if Bp != B:
        x = jnp.pad(x, ((0, Bp - B), (0, 0)))

    grid = (Bp // block_b,)
    out = pl.pallas_call(
        policy_mlp_kernel,
        out_shape=jax.ShapeDtypeStruct((Bp, out_pad), jnp.float32),
        grid_spec=pltpu.PrefetchScalarGridSpec(
            num_scalar_prefetch=0,
            grid=grid,
            in_specs=[
                pl.BlockSpec((block_b, in_dim), lambda i: (i, 0)),  # x tile (f32)
                pl.BlockSpec((in_dim, HIDDEN), lambda i: (0, 0)),   # w1 (resident)
                pl.BlockSpec((1, HIDDEN), lambda i: (0, 0)),        # b1 row
                pl.BlockSpec((HIDDEN, out_pad), lambda i: (0, 0)),  # w2 (resident)
                pl.BlockSpec((1, out_pad), lambda i: (0, 0)),       # b2 row
            ],
            out_specs=pl.BlockSpec((block_b, out_pad), lambda i: (i, 0)),
        ),
        compiler_params=pltpu.CompilerParams(
            dimension_semantics=("parallel",),  # batch tiles shard over TCs (v7x)
            vmem_limit_bytes=16 << 20,          # headroom for 512-row tiles
        ),
    )(x, params["w1"], params["b1"], params["w2"], params["b2"])

    # Slice off batch / lane padding outside the kernel.
    return out[:B, :out_dim]


def init_params(key, input_dim, hidden_dim, output_dim):
    """Deterministic init mimicking torch.nn.Linear default
    (U[-1/sqrt(fan_in), 1/sqrt(fan_in)]). Weights stored as (in, out)."""
    k1, k2, k3, k4 = jax.random.split(key, 4)
    bound1 = 1.0 / jnp.sqrt(jnp.float32(input_dim))
    bound2 = 1.0 / jnp.sqrt(jnp.float32(hidden_dim))
    w1 = jax.random.uniform(k1, (input_dim, hidden_dim), jnp.float32, -bound1, bound1)
    b1 = jax.random.uniform(k2, (hidden_dim,), jnp.float32, -bound1, bound1)
    w2 = jax.random.uniform(k3, (hidden_dim, output_dim), jnp.float32, -bound2, bound2)
    b2 = jax.random.uniform(k4, (output_dim,), jnp.float32, -bound2, bound2)
    return w1, b1, w2, b2


if __name__ == "__main__":
    key = jax.random.PRNGKey(0)
    k_params, k_x = jax.random.split(key)

    batch = 256          # -> block_b=128, grid=(2,): both v7x TCs get a tile
    input_dim = 32
    hidden_dim = HIDDEN  # 256, fixed by the module
    output_dim = 16

    w1, b1, w2, b2 = init_params(k_params, input_dim, hidden_dim, output_dim)
    x = jax.random.normal(k_x, (batch, input_dim), jnp.float32)

    # Weight prep hoisted out of the forward path (done once per param update).
    params = prepare_params(w1, b1, w2, b2)

    logits = policy_network_forward(x, params)
    logits = jax.block_until_ready(logits)

    # Pure-JAX f32 reference of the forward semantics; kernel uses bf16 matmul
    # operands (f32 accumulation) so tolerance is set accordingly.
    ref = jnp.maximum(x @ w1 + b1, 0.0) @ w2 + b2
    assert logits.shape == (batch, output_dim)
    assert jnp.allclose(logits, ref, atol=3e-2, rtol=3e-2), (
        float(jnp.max(jnp.abs(logits - ref))))

    print("KERNEL_OK")
</pallas_src>

<mosaic_0001>
module attributes {stable_mosaic.version = 11 : i64} {
  func.func @policy_mlp_kernel(%arg0: i32, %arg1: memref<128x32xf32, #tpu.memory_space<vmem>>, %arg2: memref<32x256xbf16, #tpu.memory_space<vmem>>, %arg3: memref<1x256xf32, #tpu.memory_space<vmem>>, %arg4: memref<256x128xbf16, #tpu.memory_space<vmem>>, %arg5: memref<1x128xf32, #tpu.memory_space<vmem>>, %arg6: memref<128x128xf32, #tpu.memory_space<vmem>>) attributes {dimension_semantics = [#tpu.dimension_semantics<parallel>], iteration_bounds = array<i64: 2>, scalar_prefetch = 0 : i64, scratch_operands = 0 : i64, tpu.core_type = #tpu.core_type<tc>, window_params = [{transform_indices = @transform_0, window_bounds = array<i64: 128, 32>}, {pipeline_mode = #tpu.pipeline_mode<synchronous>, transform_indices = @transform_1, window_bounds = array<i64: 32, 256>}, {pipeline_mode = #tpu.pipeline_mode<synchronous>, transform_indices = @transform_2, window_bounds = array<i64: 1, 256>}, {pipeline_mode = #tpu.pipeline_mode<synchronous>, transform_indices = @transform_3, window_bounds = array<i64: 256, 128>}, {pipeline_mode = #tpu.pipeline_mode<synchronous>, transform_indices = @transform_4, window_bounds = array<i64: 1, 128>}, {transform_indices = @transform_5, window_bounds = array<i64: 128, 128>}]} {
    %c0 = arith.constant 0 : index
    %c0_0 = arith.constant 0 : index
    %0 = vector.load %arg1[%c0, %c0_0] : memref<128x32xf32, #tpu.memory_space<vmem>>, vector<128x32xf32>
    %1 = arith.truncf %0 : vector<128x32xf32> to vector<128x32xbf16>
    %c0_1 = arith.constant 0 : index
    %c0_2 = arith.constant 0 : index
    %2 = vector.load %arg2[%c0_1, %c0_2] : memref<32x256xbf16, #tpu.memory_space<vmem>>, vector<32x256xbf16>
    %cst = arith.constant dense<0.000000e+00> : vector<128x256xf32>
    %3 = tpu.matmul %1, %2, %cst {dimension_numbers = #tpu.dot_dimension_numbers<[1], [0], [0], [1], [0, 0, 1, 1], [], []>} : vector<128x32xbf16>, vector<32x256xbf16>, vector<128x256xf32> -> vector<128x256xf32>
    %c0_3 = arith.constant 0 : index
    %c0_4 = arith.constant 0 : index
    %4 = vector.load %arg3[%c0_3, %c0_4] : memref<1x256xf32, #tpu.memory_space<vmem>>, vector<1x256xf32>
    %5 = vector.broadcast %4 : vector<1x256xf32> to vector<128x256xf32>
    %6 = arith.addf %3, %5 : vector<128x256xf32>
    %cst_5 = arith.constant 0.000000e+00 : f32
    %7 = vector.broadcast %cst_5 : f32 to vector<128x256xf32>
    %8 = arith.maximumf %6, %7 : vector<128x256xf32>
    %9 = arith.truncf %8 : vector<128x256xf32> to vector<128x256xbf16>
    %c0_6 = arith.constant 0 : index
    %c0_7 = arith.constant 0 : index
    %10 = vector.load %arg4[%c0_6, %c0_7] : memref<256x128xbf16, #tpu.memory_space<vmem>>, vector<256x128xbf16>
    %cst_8 = arith.constant dense<0.000000e+00> : vector<128x128xf32>
    %11 = tpu.matmul %9, %10, %cst_8 {dimension_numbers = #tpu.dot_dimension_numbers<[1], [0], [0], [1], [0, 0, 1, 1], [], []>} : vector<128x256xbf16>, vector<256x128xbf16>, vector<128x128xf32> -> vector<128x128xf32>
    %c0_9 = arith.constant 0 : index
    %c0_10 = arith.constant 0 : index
    %12 = vector.load %arg5[%c0_9, %c0_10] : memref<1x128xf32, #tpu.memory_space<vmem>>, vector<1x128xf32>
    %13 = vector.broadcast %12 : vector<1x128xf32> to vector<128x128xf32>
    %14 = arith.addf %11, %13 : vector<128x128xf32>
    %c0_11 = arith.constant 0 : index
    %c0_12 = arith.constant 0 : index
    %15 = vector.load %arg6[%c0_11, %c0_12] : memref<128x128xf32, #tpu.memory_space<vmem>>, vector<128x128xf32>
    tpu.vector_store %arg6[%c0_11, %c0_12], %14 {strides = array<i32>} : memref<128x128xf32, #tpu.memory_space<vmem>>, vector<128x128xf32>,
    return
  }
  func.func @transform_0(%arg0: i32) -> (i32, i32) {
    %c0_i32 = arith.constant 0 : i32
    %c0_i32_0 = arith.constant 0 : i32
    return %arg0, %c0_i32 : i32, i32
  }
  func.func @transform_1(%arg0: i32) -> (i32, i32) {
    %c0_i32 = arith.constant 0 : i32
    %c0_i32_0 = arith.constant 0 : i32
    %c0_i32_1 = arith.constant 0 : i32
    return %c0_i32, %c0_i32_0 : i32, i32
  }
  func.func @transform_2(%arg0: i32) -> (i32, i32) {
    %c0_i32 = arith.constant 0 : i32
    %c0_i32_0 = arith.constant 0 : i32
    %c0_i32_1 = arith.constant 0 : i32
    return %c0_i32, %c0_i32_0 : i32, i32
  }
  func.func @transform_3(%arg0: i32) -> (i32, i32) {
    %c0_i32 = arith.constant 0 : i32
    %c0_i32_0 = arith.constant 0 : i32
    %c0_i32_1 = arith.constant 0 : i32
    return %c0_i32, %c0_i32_0 : i32, i32
  }
  func.func @transform_4(%arg0: i32) -> (i32, i32) {
    %c0_i32 = arith.constant 0 : i32
    %c0_i32_0 = arith.constant 0 : i32
    %c0_i32_1 = arith.constant 0 : i32
    return %c0_i32, %c0_i32_0 : i32, i32
  }
  func.func @transform_5(%arg0: i32) -> (i32, i32) {
    %c0_i32 = arith.constant 0 : i32
    %c0_i32_0 = arith.constant 0 : i32
    return %arg0, %c0_i32 : i32, i32
  }
}

</mosaic_0001>

<llo_original>
// kernel: tpu_custom_call.1
$region0: #{tpu_custom_call.1}
  #allocation0 [shape = 'u32[]', space=smem, size = 0x4, offset = 0x4, fixed_abs, tag = 'smem constant byte address 0x4 - core index']
  #allocation1 [shape = 'u32[144,128]{1,0:T(1,128)}', space=vmem, size = 0x12000, scoped, tag = 'internal scratch']
  %s0 = inlined_call_operand.vmem [shape: f32[256,32], index: 0, kind: input, shape index: {}]
  %s1 = inlined_call_operand.vmem [shape: bf16[32,256], index: 1, kind: input, shape index: {}]
  %s2 = inlined_call_operand.vmem [shape: f32[1,256], index: 2, kind: input, shape index: {}]
  %s3 = inlined_call_operand.vmem [shape: bf16[256,128], index: 3, kind: input, shape index: {}]
  %s4 = inlined_call_operand.vmem [shape: f32[1,128], index: 4, kind: input, shape index: {}]
  %s5 = inlined_call_operand.hbm [shape: f32[256,128], index: 5, kind: output, shape index: {}]
  %s6 = sld [smem:[#allocation0]]
  $region53: #{tpu_custom_call.1} parent=0
    _
  %s8 = ssub.s32 1, %s6
  %s9 = scalar_select 0, %s8, %s6
  $region1: #{tpu_custom_call.1} parent=0
    #allocation2 [shape = 'u8[131072]{0}', space=vmem, size = 0x20000, scoped, tag = 'output window, operand 0']
    #allocation3 [shape = 's32[2]{0}', space=sflag, size = 0x8, scoped, tag = 'scoped memory for tpu_custom_call.1']
    %10 = vsyncpa [#allocation3], 0
    %s11 = scalar_lea.sflag [#allocation3], 1
    %12 = vsyncpa %s11, 0
    loop: start=0, step=1, limit=4
    $region2: #{tpu_custom_call.1} parent=1 // loop_pre_header
      _
    $region3: #{tpu_custom_call.1} parent=1 // loop_header
      %s14 = sphi 0, %s18
      %p15 = scmp.ge.s32.totalorder %s14, 4
      %s24 = sphi 0, %s26
      %s27 = sphi 0, %s24
      %s28 = sphi 0, %s27
      %s44 = sphi 0, %s28
      %s48 = sphi 0, %s48
      %s50 = sphi 0, %s48
      %s51 = sphi 0, %s50
      %s65 = sphi 0, %s51
      %s69 = sphi 0, %s69
      %s71 = sphi 0, %s69
      %s72 = sphi 0, %s71
      %s86 = sphi 0, %s72
      %s90 = sphi 0, %s90
      %s92 = sphi 0, %s90
      %s93 = sphi 0, %s92
      %s107 = sphi 0, %s93
      %s111 = sphi 0, %s111
      %s113 = sphi 0, %s111
      %s114 = sphi 0, %s113
      %s128 = sphi 0, %s114
      %s134 = sphi 0, %s136
      %s137 = sphi 0, %s134
      %s138 = sphi 0, %s137
      %s154 = sphi 0, %s138
    $region4: #{tpu_custom_call.1} parent=1 // loop_header_branch
      %17 = sbr.rel (%p15) target = $region8
    $region5: #{tpu_custom_call.1} parent=1 // loop_body
      %s19 = ssub.s32 %s14, 1
      %s20 = ssub.s32 %s14, 2
      %s21 = sadd.s32 %s14, 1
      %s22 = ssub.s32 %s14, %s21
      %p23 = scmp.eq.s32.totalorder %s22, 0
      %s25 = sadd.s32 %s24, 1
      %s26 = scalar_select %p23, %s24, %s25
      %p29 = pneg %p23
      %p30 = scmp.eq.s32.totalorder %s14, 1
      %p31 = por %p29, %p30
      %p32 = scmp.ne.s32.totalorder %s24, %s27
      %p33 = scmp.eq.s32.totalorder %s14, 0
      %p34 = por %p32, %p33
      %p35 = scmp.ne.s32.totalorder %s24, %s27
      %p36 = scmp.eq.s32.totalorder %s19, 1
      %p37 = por %p35, %p36
      %p38 = scmp.ne.s32.totalorder %s27, %s28
      %p39 = scmp.eq.s32.totalorder %s19, 0
      %p40 = por %p38, %p39
      %p41 = scmp.ne.s32.totalorder %s27, %s28
      %p42 = scmp.eq.s32.totalorder %s20, 1
      %p43 = por %p41, %p42
      %p45 = scmp.ne.s32.totalorder %s28, %s44
      %p46 = scmp.eq.s32.totalorder %s20, 0
      %p47 = por %p45, %p46
      %s49 = sadd.s32 %s48, 1
      %p52 = scmp.eq.s32.totalorder %s14, 1
      %p53 = scmp.ne.s32.totalorder %s48, %s50
      %p54 = scmp.eq.s32.totalorder %s14, 0
      %p55 = por %p53, %p54
      %p56 = scmp.ne.s32.totalorder %s48, %s50
      %p57 = scmp.eq.s32.totalorder %s19, 1
      %p58 = por %p56, %p57
      %p59 = scmp.ne.s32.totalorder %s50, %s51
      %p60 = scmp.eq.s32.totalorder %s19, 0
      %p61 = por %p59, %p60
      %p62 = scmp.ne.s32.totalorder %s50, %s51
      %p63 = scmp.eq.s32.totalorder %s20, 1
      %p64 = por %p62, %p63
      %p66 = scmp.ne.s32.totalorder %s51, %s65
      %p67 = scmp.eq.s32.totalorder %s20, 0
      %p68 = por %p66, %p67
      %s70 = sadd.s32 %s69, 1
      %p73 = scmp.eq.s32.totalorder %s14, 1
      %p74 = scmp.ne.s32.totalorder %s69, %s71
      %p75 = scmp.eq.s32.totalorder %s14, 0
      %p76 = por %p74, %p75
      %p77 = scmp.ne.s32.totalorder %s69, %s71
      %p78 = scmp.eq.s32.totalorder %s19, 1
      %p79 = por %p77, %p78
      %p80 = scmp.ne.s32.totalorder %s71, %s72
      %p81 = scmp.eq.s32.totalorder %s19, 0
      %p82 = por %p80, %p81
      %p83 = scmp.ne.s32.totalorder %s71, %s72
      %p84 = scmp.eq.s32.totalorder %s20, 1
      %p85 = por %p83, %p84
      %p87 = scmp.ne.s32.totalorder %s72, %s86
      %p88 = scmp.eq.s32.totalorder %s20, 0
      %p89 = por %p87, %p88
      %s91 = sadd.s32 %s90, 1
      %p94 = scmp.eq.s32.totalorder %s14, 1
      %p95 = scmp.ne.s32.totalorder %s90, %s92
      %p96 = scmp.eq.s32.totalorder %s14, 0
      %p97 = por %p95, %p96
      %p98 = scmp.ne.s32.totalorder %s90, %s92
      %p99 = scmp.eq.s32.totalorder %s19, 1
      %p100 = por %p98, %p99
      %p101 = scmp.ne.s32.totalorder %s92, %s93
      %p102 = scmp.eq.s32.totalorder %s19, 0
      %p103 = por %p101, %p102
      %p104 = scmp.ne.s32.totalorder %s92, %s93
      %p105 = scmp.eq.s32.totalorder %s20, 1
      %p106 = por %p104, %p105
      %p108 = scmp.ne.s32.totalorder %s93, %s107
      %p109 = scmp.eq.s32.totalorder %s20, 0
      %p110 = por %p108, %p109
      %s112 = sadd.s32 %s111, 1
      %p115 = scmp.eq.s32.totalorder %s14, 1
      %p116 = scmp.ne.s32.totalorder %s111, %s113
      %p117 = scmp.eq.s32.totalorder %s14, 0
      %p118 = por %p116, %p117
      %p119 = scmp.ne.s32.totalorder %s111, %s113
      %p120 = scmp.eq.s32.totalorder %s19, 1
      %p121 = por %p119, %p120
      %p122 = scmp.ne.s32.totalorder %s113, %s114
      %p123 = scmp.eq.s32.totalorder %s19, 0
      %p124 = por %p122, %p123
      %p125 = scmp.ne.s32.totalorder %s113, %s114
      %p126 = scmp.eq.s32.totalorder %s20, 1
      %p127 = por %p125, %p126
      %p129 = scmp.ne.s32.totalorder %s114, %s128
      %p130 = scmp.eq.s32.totalorder %s20, 0
      %p131 = por %p129, %p130
      %s132 = ssub.s32 %s14, %s21
      %p133 = scmp.eq.s32.totalorder %s132, 0
      %s135 = sadd.s32 %s134, 1
      %s136 = scalar_select %p133, %s134, %s135
      %p139 = pneg %p133
      %p140 = scmp.eq.s32.totalorder %s14, 1
      %p141 = por %p139, %p140
      %p142 = scmp.ne.s32.totalorder %s134, %s137
      %p143 = scmp.eq.s32.totalorder %s14, 0
      %p144 = por %p142, %p143
      %p145 = scmp.ne.s32.totalorder %s134, %s137
      %p146 = scmp.eq.s32.totalorder %s19, 1
      %p147 = por %p145, %p146
      %p148 = scmp.ne.s32.totalorder %s137, %s138
      %p149 = scmp.eq.s32.totalorder %s19, 0
      %p150 = por %p148, %p149
      %p151 = scmp.ne.s32.totalorder %s137, %s138
      %p152 = scmp.eq.s32.totalorder %s20, 1
      %p153 = por %p151, %p152
      %p155 = scmp.ne.s32.totalorder %s138, %s154
      %p156 = scmp.eq.s32.totalorder %s20, 0
      %p157 = por %p155, %p156
      %p158 = scmp.le.s32.totalorder 1, %s14
      %p159 = scmp.lt.s32.totalorder %s14, 3
      %p160 = pnand %p158, %p159
      %p161 = pneg %p160
      // Predicated region
      $region9: #{tpu_custom_call.1} parent=5 // pred_check
        _
      $region10: #{tpu_custom_call.1} parent=5 // pred_check_branch
        %163 = sbr.rel (%p160) target = $region12
      $region11: #{tpu_custom_call.1} parent=5 // pred_region
        %s164 = ssub.s32 %s14, 1
        // Predicated region
        $region13: #{tpu_custom_call.1} parent=11 // pred_check
          %p165 = pneg %p61
        $region14: #{tpu_custom_call.1} parent=11 // pred_check_branch
          %167 = sbr.rel (%p165) target = $region16
        $region15: #{tpu_custom_call.1} parent=11 // pred_region
          _
        $region16: #{tpu_custom_call.1} parent=11 // pred_fallthru
          _
        // Predicated region
        $region17: #{tpu_custom_call.1} parent=11 // pred_check
          %p168 = pneg %p82
        $region18: #{tpu_custom_call.1} parent=11 // pred_check_branch
          %170 = sbr.rel (%p168) target = $region20
        $region19: #{tpu_custom_call.1} parent=11 // pred_region
          _
        $region20: #{tpu_custom_call.1} parent=11 // pred_fallthru
          _
        // Predicated region
        $region21: #{tpu_custom_call.1} parent=11 // pred_check
          %p171 = pneg %p103
        $region22: #{tpu_custom_call.1} parent=11 // pred_check_branch
          %173 = sbr.rel (%p171) target = $region24
        $region23: #{tpu_custom_call.1} parent=11 // pred_region
          _
        $region24: #{tpu_custom_call.1} parent=11 // pred_fallthru
          _
        // Predicated region
        $region25: #{tpu_custom_call.1} parent=11 // pred_check
          %p174 = pneg %p124
        $region26: #{tpu_custom_call.1} parent=11 // pred_check_branch
          %176 = sbr.rel (%p174) target = $region28
        $region27: #{tpu_custom_call.1} parent=11 // pred_region
          _
        $region28: #{tpu_custom_call.1} parent=11 // pred_fallthru
          _
      $region12: #{tpu_custom_call.1} parent=5 // pred_fallthru
        _
      %p177 = scmp.lt.s32.totalorder %s14, 2
      // Predicated region
      $region29: #{tpu_custom_call.1} parent=5 // pred_check
        %p178 = pneg %p177
      $region30: #{tpu_custom_call.1} parent=5 // pred_check_branch
        %180 = sbr.rel (%p178) target = $region32
      $region31: #{tpu_custom_call.1} parent=5 // pred_region
        // Predicated region
        $region33: #{tpu_custom_call.1} parent=31 // pred_check
          %p181 = pneg %p34
        $region34: #{tpu_custom_call.1} parent=31 // pred_check_branch
          %183 = sbr.rel (%p181) target = $region36
        $region35: #{tpu_custom_call.1} parent=31 // pred_region
          %s184 = smul.u32 16, %s14
          %p185 = scmp.lt.s32.totalorder %s184, 31
          %s186 = scalar_select %p185, %s184, 31
          %s187 = smul.addr %s186, 8
          %s188 = scalar_lea.vmem %s0, %s187
          %s189 = smul.u32 16, %s14
        $region36: #{tpu_custom_call.1} parent=31 // pred_fallthru
          _
      $region32: #{tpu_custom_call.1} parent=5 // pred_fallthru
        _
      %p190 = scmp.le.s32.totalorder 1, %s14
      %p191 = scmp.lt.s32.totalorder %s14, 3
      %p192 = pnand %p190, %p191
      %p193 = pneg %p192
      // Predicated region
      $region37: #{tpu_custom_call.1} parent=5 // pred_check
        _
      $region38: #{tpu_custom_call.1} parent=5 // pred_check_branch
        %195 = sbr.rel (%p192) target = $region40
      $region39: #{tpu_custom_call.1} parent=5 // pred_region
        %s196 = ssub.s32 %s14, 1
        %s197 = smul.u32 16, %s19
        %p198 = scmp.lt.s32.totalorder %s197, 31
        %s199 = scalar_select %p198, %s197, 31
        %s200 = smul.addr %s199, 8
        %s201 = scalar_lea.vmem %s0, %s200
        %p202 = pneg %p40
        %p203 = pneg %p37
        %p204 = pneg %p61
        %p205 = pneg %p58
        %p206 = pneg %p82
        %p207 = pneg %p79
        %p208 = pneg %p103
        %p209 = pneg %p100
        %p210 = pneg %p124
        %p211 = pneg %p121
        %p212 = pneg %p150
        %p213 = pneg %p147
        %s214 = sand.u32 %s137, 1
        %s215 = scalar_lea.sflag [#allocation3], %s214
        %s216 = sand.u32 %s137, 1
        %s217 = smul.addr %s216, 128
        %s218 = scalar_lea.vmem [#allocation2], %s217
        %s219 = smul.u32 16, %s19
        %p220 = scmp.lt.s32.totalorder %s219, 31
        %s221 = scalar_select %p220, %s219, 31
        %s222 = smul.addr %s221, 8
        %s223 = scalar_lea.vmem %s0, %s222
        %s224 = smul.u32 16, %s19
        %s225 = smul.u32 16, %s19
        %v227 = vld [vmem:[%s223] sm:$0xff]
        %v228 = vld [vmem:[%s223 + $0x8] sm:$0xff]
        %v229 = vld [vmem:[%s223 + $0x10] sm:$0xff]
        %v230 = vld [vmem:[%s223 + $0x18] sm:$0xff]
        %v231 = vld [vmem:[%s223 + $0x20] sm:$0xff]
        %v232 = vld [vmem:[%s223 + $0x28] sm:$0xff]
        %v233 = vld [vmem:[%s223 + $0x30] sm:$0xff]
        %v234 = vld [vmem:[%s223 + $0x38] sm:$0xff]
        %v235 = vld [vmem:[%s223 + $0x40] sm:$0xff]
        %v236 = vld [vmem:[%s223 + $0x48] sm:$0xff]
        %v237 = vld [vmem:[%s223 + $0x50] sm:$0xff]
        %v238 = vld [vmem:[%s223 + $0x58] sm:$0xff]
        %v239 = vld [vmem:[%s223 + $0x60] sm:$0xff]
        %v240 = vld [vmem:[%s223 + $0x68] sm:$0xff]
        %v241 = vld [vmem:[%s223 + $0x70] sm:$0xff]
        %v242 = vld [vmem:[%s223 + $0x78] sm:$0xff]
        %v243 = vpack.c.bf16 %v228, %v227
        %v244 = vpack.c.bf16 %v230, %v229
        %v245 = vpack.c.bf16 %v232, %v231
        %v246 = vpack.c.bf16 %v234, %v233
        %v247 = vpack.c.bf16 %v236, %v235
        %v248 = vpack.c.bf16 %v238, %v237
        %v249 = vpack.c.bf16 %v240, %v239
        %v250 = vpack.c.bf16 %v242, %v241
        %v251 = vld [vmem:[%s1] sm:$0xff]
        %v252 = vld [vmem:[%s1 + $0x8] sm:$0xff]
        %v253 = vld [vmem:[%s1 + $0x10] sm:$0xff]
        %v254 = vld [vmem:[%s1 + $0x18] sm:$0xff]
        %v255 = vld [vmem:[%s2] sm:$0x3]
        %v257 = vlaneseq
        %v258 = vshrl.u32 %v257, 7
        %v259 = vsub.s32 0, %v258
        %v260 = vrot.slane %v255, %v259
        %v261 = vlaneseq
        %v262 = vshrl.u32 %v261, 7
        %v263 = vsub.s32 1, %v262
        %v264 = vrot.slane %v255, %v263
        %v271 = vunpack.c.l.b16 %v251
        %v272 = vunpack.c.h.b16 %v251
        %v273 = vunpack.c.l.b16 %v252
        %v274 = vunpack.c.h.b16 %v252
        %v275 = vunpack.c.l.b16 %v253
        %v276 = vunpack.c.h.b16 %v253
        %v277 = vunpack.c.l.b16 %v254
        %v278 = vunpack.c.h.b16 %v254
        %v279 = vpack.c.b16 %v273, %v271
        %v280 = vpack.c.b16 %v274, %v272
        %v281 = vpack.c.b16 %v277, %v275
        %v282 = vpack.c.b16 %v278, %v276
        %vm287 = vcmask 261120
        %v289 = vsel %vm287, %v243, 0
        %v292 = vsel %vm287, %v244, 0
        %v295 = vsel %vm287, %v245, 0
        %v298 = vsel %vm287, %v246, 0
        %v301 = vsel %vm287, %v247, 0
        %v304 = vsel %vm287, %v248, 0
        %v307 = vsel %vm287, %v249, 0
        %v310 = vsel %vm287, %v250, 0
        %312 = vmatprep.subr.bf16.mxu0 %v280
        %313 = vmatpush1.bf16.msra.mxu0 %v279
        %314 = vmatprep.subr.bf16.mxu0 %v282
        %315 = vmatpush1.bf16.msra.mxu0 %v281
        %316 = vmatprep.subr.bf16.mxu0 0
        %317 = vmatpush1.bf16.msra.mxu0 0
        %318 = vmatprep.subr.bf16.mxu0 0
        %319 = vmatpush1.bf16.msra.mxu0 0
        %320 = vmatprep.subr.bf16.mxu0 0
        %321 = vmatpush1.bf16.msra.mxu0 0
        %322 = vmatprep.subr.bf16.mxu0 0
        %323 = vmatpush1.bf16.msra.mxu0 0
        %324 = vmatprep.subr.bf16.mxu0 0
        %325 = vmatpush1.bf16.msra.mxu0 0
        %326 = vmatprep.subr.bf16.mxu0 0
        %327 = vmatpush1.bf16.msra.mxu0 0
        %328 = vmatprep.subr.bf16.mxu0 0
        %329 = vmatpush1.bf16.msra.mxu0 0
        %330 = vmatprep.subr.bf16.mxu0 0
        %331 = vmatpush1.bf16.msra.mxu0 0
        %332 = vmatprep.subr.bf16.mxu0 0
        %333 = vmatpush1.bf16.msra.mxu0 0
        %334 = vmatprep.subr.bf16.mxu0 0
        %335 = vmatpush1.bf16.msra.mxu0 0
        %336 = vmatprep.subr.bf16.mxu0 0
        %337 = vmatpush1.bf16.msra.mxu0 0
        %338 = vmatprep.subr.bf16.mxu0 0
        %339 = vmatpush1.bf16.msra.mxu0 0
        %340 = vmatprep.subr.bf16.mxu0 0
        %341 = vmatpush1.bf16.msra.mxu0 0
        %342 = vmatprep.subr.bf16.mxu0 0
        %343 = vmatpush1.bf16.msra.mxu0 0
        %344 = vmatprep.mubr.bf16.mxu0 0
        %345 = vmatmul.mubr.bf16.gmra.mrb[0].mxu0 %v289
        %v346 = vpop.f32.mrb[0].mxu0
        %v347 = vadd.f32 %v260, %v346
        %v348 = vpop.f32.mrb[0].mxu0
        %v349 = vadd.f32 %v264, %v348
        %v350 = vpop.f32.mrb[0].mxu0
        %v351 = vadd.f32 %v260, %v350
        %v352 = vpop.f32.mrb[0].mxu0
        %v353 = vadd.f32 %v264, %v352
        %354 = vmatprep.mubr.bf16.mxu0 0
        %355 = vmatmul.mubr.bf16.gmra.mrb[0].mxu0 %v292
        %v356 = vpop.f32.mrb[0].mxu0
        %v357 = vadd.f32 %v260, %v356
        %v358 = vpop.f32.mrb[0].mxu0
        %v359 = vadd.f32 %v264, %v358
        %v360 = vpop.f32.mrb[0].mxu0
        %v361 = vadd.f32 %v260, %v360
        %v362 = vpop.f32.mrb[0].mxu0
        %v363 = vadd.f32 %v264, %v362
        %364 = vmatprep.mubr.bf16.mxu0 0
        %365 = vmatmul.mubr.bf16.gmra.mrb[0].mxu0 %v295
        %v366 = vpop.f32.mrb[0].mxu0
        %v367 = vadd.f32 %v260, %v366
        %v368 = vpop.f32.mrb[0].mxu0
        %v369 = vadd.f32 %v264, %v368
        %v370 = vpop.f32.mrb[0].mxu0
        %v371 = vadd.f32 %v260, %v370
        %v372 = vpop.f32.mrb[0].mxu0
        %v373 = vadd.f32 %v264, %v372
        %374 = vmatprep.mubr.bf16.mxu0 0
        %375 = vmatmul.mubr.bf16.gmra.mrb[0].mxu0 %v298
        %v376 = vpop.f32.mrb[0].mxu0
        %v377 = vadd.f32 %v260, %v376
        %v378 = vpop.f32.mrb[0].mxu0
        %v379 = vadd.f32 %v264, %v378
        %v380 = vpop.f32.mrb[0].mxu0
        %v381 = vadd.f32 %v260, %v380
        %v382 = vpop.f32.mrb[0].mxu0
        %v383 = vadd.f32 %v264, %v382
        %384 = vmatprep.mubr.bf16.mxu0 0
        %385 = vmatmul.mubr.bf16.gmra.mrb[0].mxu0 %v301
        %v386 = vpop.f32.mrb[0].mxu0
        %v387 = vadd.f32 %v260, %v386
        %v388 = vpop.f32.mrb[0].mxu0
        %v389 = vadd.f32 %v264, %v388
        %v390 = vpop.f32.mrb[0].mxu0
        %v391 = vadd.f32 %v260, %v390
        %v392 = vpop.f32.mrb[0].mxu0
        %v393 = vadd.f32 %v264, %v392
        %394 = vmatprep.mubr.bf16.mxu0 0
        %395 = vmatmul.mubr.bf16.gmra.mrb[0].mxu0 %v304
        %v396 = vpop.f32.mrb[0].mxu0
        %v397 = vadd.f32 %v260, %v396
        %v398 = vpop.f32.mrb[0].mxu0
        %v399 = vadd.f32 %v264, %v398
        %v400 = vpop.f32.mrb[0].mxu0
        %v401 = vadd.f32 %v260, %v400
        %v402 = vpop.f32.mrb[0].mxu0
        %v403 = vadd.f32 %v264, %v402
        %404 = vmatprep.mubr.bf16.mxu0 0
        %405 = vmatmul.mubr.bf16.gmra.mrb[0].mxu0 %v307
        %v406 = vpop.f32.mrb[0].mxu0
        %v407 = vadd.f32 %v260, %v406
        %v408 = vpop.f32.mrb[0].mxu0
        %v409 = vadd.f32 %v264, %v408
        %v410 = vpop.f32.mrb[0].mxu0
        %v411 = vadd.f32 %v260, %v410
        %v412 = vpop.f32.mrb[0].mxu0
        %v413 = vadd.f32 %v264, %v412
        %414 = vmatprep.mubr.bf16.mxu0 0
        %415 = vmatmul.mubr.bf16.gmra.mrb[0].mxu0 %v310
        %v416 = vpop.f32.mrb[0].mxu0
        %v417 = vadd.f32 %v260, %v416
        %v418 = vpop.f32.mrb[0].mxu0
        %v419 = vadd.f32 %v264, %v418
        %v420 = vpop.f32.mrb[0].mxu0
        %v421 = vadd.f32 %v260, %v420
        %v422 = vpop.f32.mrb[0].mxu0
        %v423 = vadd.f32 %v264, %v422
        %424 = vdwg.mxu0
        %v425 = vmax.f32 %v347, 0.0
        %v426 = vmax.f32 %v349, 0.0
        %v427 = vmax.f32 %v351, 0.0
        %v428 = vmax.f32 %v353, 0.0
        %v429 = vmax.f32 %v357, 0.0
        %v430 = vmax.f32 %v359, 0.0
        %v431 = vmax.f32 %v361, 0.0
        %v432 = vmax.f32 %v363, 0.0
        %v433 = vmax.f32 %v367, 0.0
        %v434 = vmax.f32 %v369, 0.0
        %v435 = vmax.f32 %v371, 0.0
        %v436 = vmax.f32 %v373, 0.0
        %v437 = vmax.f32 %v377, 0.0
        %v438 = vmax.f32 %v379, 0.0
        %v439 = vmax.f32 %v381, 0.0
        %v440 = vmax.f32 %v383, 0.0
        %v441 = vmax.f32 %v387, 0.0
        %v442 = vmax.f32 %v389, 0.0
        %v443 = vmax.f32 %v391, 0.0
        %v444 = vmax.f32 %v393, 0.0
        %v445 = vmax.f32 %v397, 0.0
        %v446 = vmax.f32 %v399, 0.0
        %v447 = vmax.f32 %v401, 0.0
        %v448 = vmax.f32 %v403, 0.0
        %v449 = vmax.f32 %v407, 0.0
        %v450 = vmax.f32 %v409, 0.0
        %v451 = vmax.f32 %v411, 0.0
        %v452 = vmax.f32 %v413, 0.0
        %v453 = vmax.f32 %v417, 0.0
        %v454 = vmax.f32 %v419, 0.0
        %v455 = vmax.f32 %v421, 0.0
        %v456 = vmax.f32 %v423, 0.0
        %v457 = vpack.c.bf16 %v427, %v425
        %v458 = vpack.c.bf16 %v428, %v426
        %v459 = vpack.c.bf16 %v431, %v429
        %v460 = vpack.c.bf16 %v432, %v430
        %v461 = vpack.c.bf16 %v435, %v433
        %v462 = vpack.c.bf16 %v436, %v434
        %v463 = vpack.c.bf16 %v439, %v437
        %v464 = vpack.c.bf16 %v440, %v438
        %v465 = vpack.c.bf16 %v443, %v441
        %v466 = vpack.c.bf16 %v444, %v442
        %v467 = vpack.c.bf16 %v447, %v445
        %v468 = vpack.c.bf16 %v448, %v446
        %v469 = vpack.c.bf16 %v451, %v449
        %v470 = vpack.c.bf16 %v452, %v450
        %v471 = vpack.c.bf16 %v455, %v453
        %v472 = vpack.c.bf16 %v456, %v454
        %v473 = vld [vmem:[%s3] sm:$0xf]
        %v474 = vld [vmem:[%s3 + $0x4] sm:$0xf]
        %v475 = vld [vmem:[%s3 + $0x8] sm:$0xf]
        %v476 = vld [vmem:[%s3 + $0xc] sm:$0xf]
        %v477 = vld [vmem:[%s3 + $0x10] sm:$0xf]
        %v478 = vld [vmem:[%s3 + $0x14] sm:$0xf]
        %v479 = vld [vmem:[%s3 + $0x18] sm:$0xf]
        %v480 = vld [vmem:[%s3 + $0x1c] sm:$0xf]
        %v481 = vld [vmem:[%s3 + $0x20] sm:$0xf]
        %v482 = vld [vmem:[%s3 + $0x24] sm:$0xf]
        %v483 = vld [vmem:[%s3 + $0x28] sm:$0xf]
        %v484 = vld [vmem:[%s3 + $0x2c] sm:$0xf]
        %v485 = vld [vmem:[%s3 + $0x30] sm:$0xf]
        %v486 = vld [vmem:[%s3 + $0x34] sm:$0xf]
        %v487 = vld [vmem:[%s3 + $0x38] sm:$0xf]
        %v488 = vld [vmem:[%s3 + $0x3c] sm:$0xf]
        %v489 = vld [vmem:[%s3 + $0x40] sm:$0xf]
        %v490 = vld [vmem:[%s3 + $0x44] sm:$0xf]
        %v491 = vld [vmem:[%s3 + $0x48] sm:$0xf]
        %v492 = vld [vmem:[%s3 + $0x4c] sm:$0xf]
        %v493 = vld [vmem:[%s3 + $0x50] sm:$0xf]
        %v494 = vld [vmem:[%s3 + $0x54] sm:$0xf]
        %v495 = vld [vmem:[%s3 + $0x58] sm:$0xf]
        %v496 = vld [vmem:[%s3 + $0x5c] sm:$0xf]
        %v497 = vld [vmem:[%s3 + $0x60] sm:$0xf]
        %v498 = vld [vmem:[%s3 + $0x64] sm:$0xf]
        %v499 = vld [vmem:[%s3 + $0x68] sm:$0xf]
        %v500 = vld [vmem:[%s3 + $0x6c] sm:$0xf]
        %v501 = vld [vmem:[%s3 + $0x70] sm:$0xf]
        %v502 = vld [vmem:[%s3 + $0x74] sm:$0xf]
        %v503 = vld [vmem:[%s3 + $0x78] sm:$0xf]
        %v504 = vld [vmem:[%s3 + $0x7c] sm:$0xf]
        %v505 = vld [vmem:[%s4] sm:$0x1]
        %v507 = vlaneseq
        %v508 = vshrl.u32 %v507, 7
        %v509 = vsub.s32 0, %v508
        %v510 = vrot.slane %v505, %v509
        %v544 = vunpack.c.l.b16 %v473
        %v545 = vunpack.c.l.b16 %v474
        %v546 = vunpack.c.l.b16 %v475
        %v547 = vunpack.c.l.b16 %v476
        %v548 = vunpack.c.l.b16 %v477
        %v549 = vunpack.c.l.b16 %v478
        %v550 = vunpack.c.l.b16 %v479
        %v551 = vunpack.c.l.b16 %v480
        %v552 = vunpack.c.l.b16 %v481
        %v553 = vunpack.c.l.b16 %v482
        %v554 = vunpack.c.l.b16 %v483
        %v555 = vunpack.c.l.b16 %v484
        %v556 = vunpack.c.l.b16 %v485
        %v557 = vunpack.c.l.b16 %v486
        %v558 = vunpack.c.l.b16 %v487
        %v559 = vunpack.c.l.b16 %v488
        %v560 = vunpack.c.l.b16 %v489
        %v561 = vunpack.c.l.b16 %v490
        %v562 = vunpack.c.l.b16 %v491
        %v563 = vunpack.c.l.b16 %v492
        %v564 = vunpack.c.l.b16 %v493
        %v565 = vunpack.c.l.b16 %v494
        %v566 = vunpack.c.l.b16 %v495
        %v567 = vunpack.c.l.b16 %v496
        %v568 = vunpack.c.l.b16 %v497
        %v569 = vunpack.c.l.b16 %v498
        %v570 = vunpack.c.l.b16 %v499
        %v571 = vunpack.c.l.b16 %v500
        %v572 = vunpack.c.l.b16 %v501
        %v573 = vunpack.c.l.b16 %v502
        %v574 = vunpack.c.l.b16 %v503
        %v575 = vunpack.c.l.b16 %v504
        %v576 = vpack.c.b16 %v545, %v544
        %v577 = vpack.c.b16 %v547, %v546
        %v578 = vpack.c.b16 %v549, %v548
        %v579 = vpack.c.b16 %v551, %v550
        %v580 = vpack.c.b16 %v553, %v552
        %v581 = vpack.c.b16 %v555, %v554
        %v582 = vpack.c.b16 %v557, %v556
        %v583 = vpack.c.b16 %v559, %v558
        %v584 = vpack.c.b16 %v561, %v560
        %v585 = vpack.c.b16 %v563, %v562
        %v586 = vpack.c.b16 %v565, %v564
        %v587 = vpack.c.b16 %v567, %v566
        %v588 = vpack.c.b16 %v569, %v568
        %v589 = vpack.c.b16 %v571, %v570
        %v590 = vpack.c.b16 %v573, %v572
        %v591 = vpack.c.b16 %v575, %v574
        %608 = vmatprep.subr.bf16.mxu0 0
        %609 = vmatpush1.bf16.msra.mxu0 %v576
        %610 = vmatprep.subr.bf16.mxu0 0
        %611 = vmatpush1.bf16.msra.mxu0 %v577
        %612 = vmatprep.subr.bf16.mxu0 0
        %613 = vmatpush1.bf16.msra.mxu0 %v578
        %614 = vmatprep.subr.bf16.mxu0 0
        %615 = vmatpush1.bf16.msra.mxu0 %v579
        %616 = vmatprep.subr.bf16.mxu0 0
        %617 = vmatpush1.bf16.msra.mxu0 %v580
        %618 = vmatprep.subr.bf16.mxu0 0
        %619 = vmatpush1.bf16.msra.mxu0 %v581
        %620 = vmatprep.subr.bf16.mxu0 0
        %621 = vmatpush1.bf16.msra.mxu0 %v582
        %622 = vmatprep.subr.bf16.mxu0 0
        %623 = vmatpush1.bf16.msra.mxu0 %v583
        %624 = vmatprep.subr.bf16.mxu0 0
        %625 = vmatpush1.bf16.msra.mxu0 %v584
        %626 = vmatprep.subr.bf16.mxu0 0
        %627 = vmatpush1.bf16.msra.mxu0 %v585
        %628 = vmatprep.subr.bf16.mxu0 0
        %629 = vmatpush1.bf16.msra.mxu0 %v586
        %630 = vmatprep.subr.bf16.mxu0 0
        %631 = vmatpush1.bf16.msra.mxu0 %v587
        %632 = vmatprep.subr.bf16.mxu0 0
        %633 = vmatpush1.bf16.msra.mxu0 %v588
        %634 = vmatprep.subr.bf16.mxu0 0
        %635 = vmatpush1.bf16.msra.mxu0 %v589
        %636 = vmatprep.subr.bf16.mxu0 0
        %637 = vmatpush1.bf16.msra.mxu0 %v590
        %638 = vmatprep.subr.bf16.mxu0 0
        %639 = vmatpush1.bf16.msra.mxu0 %v591
        %640 = vmatprep.mubr.bf16.mxu0 %v458
        %641 = vmatmul.mubr.bf16.gmra.mrb[0].mxu0 %v457
        %v642 = vpop.f32.mrb[0].mxu0
        %v643 = vadd.f32 %v510, %v642
        %v644 = vpop.f32.mrb[0].mxu0
        %v645 = vpop.f32.mrb[0].mxu0
        %v646 = vadd.f32 %v510, %v645
        %v647 = vpop.f32.mrb[0].mxu0
        %648 = vmatprep.mubr.bf16.mxu0 %v460
        %649 = vmatmul.mubr.bf16.gmra.mrb[0].mxu0 %v459
        %v650 = vpop.f32.mrb[0].mxu0
        %v651 = vadd.f32 %v510, %v650
        %v652 = vpop.f32.mrb[0].mxu0
        %v653 = vpop.f32.mrb[0].mxu0
        %v654 = vadd.f32 %v510, %v653
        %v655 = vpop.f32.mrb[0].mxu0
        %656 = vmatprep.mubr.bf16.mxu0 %v462
        %657 = vmatmul.mubr.bf16.gmra.mrb[0].mxu0 %v461
        %v658 = vpop.f32.mrb[0].mxu0
        %v659 = vadd.f32 %v510, %v658
        %v660 = vpop.f32.mrb[0].mxu0
        %v661 = vpop.f32.mrb[0].mxu0
        %v662 = vadd.f32 %v510, %v661
        %v663 = vpop.f32.mrb[0].mxu0
        %664 = vmatprep.mubr.bf16.mxu0 %v464
        %665 = vmatmul.mubr.bf16.gmra.mrb[0].mxu0 %v463
        %v666 = vpop.f32.mrb[0].mxu0
        %v667 = vadd.f32 %v510, %v666
        %v668 = vpop.f32.mrb[0].mxu0
        %v669 = vpop.f32.mrb[0].mxu0
        %v670 = vadd.f32 %v510, %v669
        %v671 = vpop.f32.mrb[0].mxu0
        %672 = vmatprep.mubr.bf16.mxu0 %v466
        %673 = vmatmul.mubr.bf16.gmra.mrb[0].mxu0 %v465
        %v674 = vpop.f32.mrb[0].mxu0
        %v675 = vadd.f32 %v510, %v674
        %v676 = vpop.f32.mrb[0].mxu0
        %v677 = vpop.f32.mrb[0].mxu0
        %v678 = vadd.f32 %v510, %v677
        %v679 = vpop.f32.mrb[0].mxu0
        %680 = vmatprep.mubr.bf16.mxu0 %v468
        %681 = vmatmul.mubr.bf16.gmra.mrb[0].mxu0 %v467
        %v682 = vpop.f32.mrb[0].mxu0
        %v683 = vadd.f32 %v510, %v682
        %v684 = vpop.f32.mrb[0].mxu0
        %v685 = vpop.f32.mrb[0].mxu0
        %v686 = vadd.f32 %v510, %v685
        %v687 = vpop.f32.mrb[0].mxu0
        %688 = vmatprep.mubr.bf16.mxu0 %v470
        %689 = vmatmul.mubr.bf16.gmra.mrb[0].mxu0 %v469
        %v690 = vpop.f32.mrb[0].mxu0
        %v691 = vadd.f32 %v510, %v690
        %v692 = vpop.f32.mrb[0].mxu0
        %v693 = vpop.f32.mrb[0].mxu0
        %v694 = vadd.f32 %v510, %v693
        %v695 = vpop.f32.mrb[0].mxu0
        %696 = vmatprep.mubr.bf16.mxu0 %v472
        %697 = vmatmul.mubr.bf16.gmra.mrb[0].mxu0 %v471
        %v698 = vpop.f32.mrb[0].mxu0
        %v699 = vadd.f32 %v510, %v698
        %v700 = vpop.f32.mrb[0].mxu0
        %v701 = vpop.f32.mrb[0].mxu0
        %v702 = vadd.f32 %v510, %v701
        %v703 = vpop.f32.mrb[0].mxu0
        %704 = vdwg.mxu0
        %705 = vst [vmem:[%s218] sm:$0xff] %v643
        %706 = vst [vmem:[%s218 + $0x8] sm:$0xff] %v646
        %707 = vst [vmem:[%s218 + $0x10] sm:$0xff] %v651
        %708 = vst [vmem:[%s218 + $0x18] sm:$0xff] %v654
        %709 = vst [vmem:[%s218 + $0x20] sm:$0xff] %v659
        %710 = vst [vmem:[%s218 + $0x28] sm:$0xff] %v662
        %711 = vst [vmem:[%s218 + $0x30] sm:$0xff] %v667
        %712 = vst [vmem:[%s218 + $0x38] sm:$0xff] %v670
        %713 = vst [vmem:[%s218 + $0x40] sm:$0xff] %v675
        %714 = vst [vmem:[%s218 + $0x48] sm:$0xff] %v678
        %715 = vst [vmem:[%s218 + $0x50] sm:$0xff] %v683
        %716 = vst [vmem:[%s218 + $0x58] sm:$0xff] %v686
        %717 = vst [vmem:[%s218 + $0x60] sm:$0xff] %v691
        %718 = vst [vmem:[%s218 + $0x68] sm:$0xff] %v694
        %719 = vst [vmem:[%s218 + $0x70] sm:$0xff] %v699
        %720 = vst [vmem:[%s218 + $0x78] sm:$0xff] %v702
        %s721 = sand.u32 %s137, 1
        %s722 = scalar_lea.sflag [#allocation3], %s721
        %s723 = sand.u32 %s137, 1
        %s724 = smul.addr %s723, 128
        %s725 = scalar_lea.vmem [#allocation2], %s724
        // Predicated region
        $region41: #{tpu_custom_call.1} parent=39 // pred_check
          %p726 = pneg %p147
        $region42: #{tpu_custom_call.1} parent=39 // pred_check_branch
          %728 = sbr.rel (%p726) target = $region44
        $region43: #{tpu_custom_call.1} parent=39 // pred_region
          %s729 = smul.u32 16, %s19
          %s731 = ssub.s32 2048, 2048
          %732 = vsyncadd %s722, %s731
          %s733 = smul.addr %s729, 128
          %s734 = scalar_lea.hbm %s5, %s733
          %s735 = sshll.u32 %s725, 4
          %s736 = int_to_ptr.vmem [resolvable:$true] %s735
          %741 = dma.vmem_to_hbm [thread:$0]  %s736, 2048, %s734, %s722, 128, 128, 8
        $region44: #{tpu_custom_call.1} parent=39 // pred_fallthru
          _
      $region40: #{tpu_custom_call.1} parent=5 // pred_fallthru
        _
      %p742 = scmp.le.s32.totalorder 2, %s14
      // Predicated region
      $region45: #{tpu_custom_call.1} parent=5 // pred_check
        %p743 = pneg %p742
      $region46: #{tpu_custom_call.1} parent=5 // pred_check_branch
        %745 = sbr.rel (%p743) target = $region48
      $region47: #{tpu_custom_call.1} parent=5 // pred_region
        %s746 = ssub.s32 %s14, 2
        // Predicated region
        $region49: #{tpu_custom_call.1} parent=47 // pred_check
          %p747 = pneg %p153
        $region50: #{tpu_custom_call.1} parent=47 // pred_check_branch
          %749 = sbr.rel (%p747) target = $region52
        $region51: #{tpu_custom_call.1} parent=47 // pred_region
          %s750 = sand.u32 %s138, 1
          %s751 = scalar_lea.sflag [#allocation3], %s750
          %s752 = sand.u32 %s138, 1
          %s753 = smul.addr %s752, 128
          %s754 = scalar_lea.vmem [#allocation2], %s753
          %755 = dma.done %s751, 2048
        $region52: #{tpu_custom_call.1} parent=47 // pred_fallthru
          _
      $region48: #{tpu_custom_call.1} parent=5 // pred_fallthru
        _
    $region6: #{tpu_custom_call.1} parent=1 // loop_footer
      %s18 = sadd.s32 1, %s14
    $region7: #{tpu_custom_call.1} parent=1 // loop_footer_branch
      %13 = sbr.rel target = $region3
    $region8: #{tpu_custom_call.1} parent=1 // loop_exit
      _
    %756 = vsyncpa [#allocation3], 1
    %s757 = scalar_lea.sflag [#allocation3], 1
    %758 = vsyncpa %s757, 1

</llo_original>
